<compile_context>
chip_gen: v5e
topology: v5e:2x2
jax: 0.10.0
libtpu: 0.0.40
codegen_flags: <defaults>
</compile_context>

<pallas_src>
import functools

import jax
import jax.numpy as jnp
from jax.experimental import pallas as pl
from jax.experimental.pallas import tpu as pltpu


def _round_up(x, m):
    return (x + m - 1) // m * m


def _device_kind():
    try:
        return jax.devices()[0].device_kind.lower()
    except Exception:
        return ""


def _gelu_dtype(kind):
    # bf16 VPU/EUP path exists on v6e/v7x; keep f32 on v5e and older.
    if ("v6" in kind) or ("v7" in kind):
        return jnp.bfloat16
    return jnp.float32


def _mlp_kernel(x_ref, w1_ref, b1_ref, w2_ref, b2_ref, o_ref, *, compute_dtype):
    # x_ref:  (TB, IN)   f32 batch tile
    # w1_ref: (IN, HID)  bf16 first-layer weight (transposed), resident
    # b1_ref: (1, HID)   f32 first-layer bias
    # w2_ref: (HID, 1)   f32 second-layer weight column, pre-scaled by 0.5
    # b2_ref: (1, 1)     f32 second-layer bias
    # o_ref:  (TB, 1)    f32 logits
    x = x_ref[...].astype(jnp.bfloat16)  # in-kernel VPU cast (free under VALU slack)

    # classifier1 on the MXU; accumulate in f32.
    h = jnp.dot(x, w1_ref[...], preferred_element_type=jnp.float32) + b1_ref[...]

    # Exact (erf-based) GELU, matching torch.nn.functional.gelu default.  The 0.5
    # factor is folded into w2 in the wrapper, so compute h * (1 + erf(h/sqrt(2))).
    # compute_dtype is bf16 on v6e/v7x (bf16 VPU/EUP), f32 on v5e.
    hc = h.astype(compute_dtype)
    inv_sqrt2 = 0.7071067811865476
    act = hc * (1.0 + jax.lax.erf(hc * inv_sqrt2))

    # dropout: identity (eval mode)
    # TODO(synk): training-mode dropout (pltpu.prng_* mask) not implemented.

    # classifier2: (TB, HID) @ (HID, 1) on the MXU, natural orientation (no
    # transpose of the big activation), f32 accumulation.
    w2 = w2_ref[...].astype(compute_dtype)
    out = jnp.dot(act, w2, preferred_element_type=jnp.float32) + b2_ref[...]
    o_ref[...] = out.astype(o_ref.dtype)


@functools.partial(jax.jit, static_argnames=("block_b",))
def mlp_forward(x, w1_t, b1, w2_t, b2, *, block_b=8192):
    """x: (B, IN) float32 -> (B, 1) float32 logits."""
    B, IN = x.shape
    HID = w1_t.shape[1]

    kind = _device_kind()
    compute_dtype = _gelu_dtype(kind)

    # Batch tile: multiple of 128 (lane width), capped at the padded batch.  On
    # v7x (2 TensorCores per chip) also cap so the grid has >= 2 steps when the
    # batch allows it, so both cores get work.
    cap = _round_up(B, 128)
    if ("v7" in kind) and cap >= 256:
        cap = _round_up(pl.cdiv(cap, 2), 128)
    block_b = max(128, min(_round_up(block_b, 128), cap))
    Bp = _round_up(B, block_b)
    if Bp != B:
        x = jnp.pad(x, ((0, Bp - B), (0, 0)))
    grid_b = Bp // block_b

    # Constant-weight prep (tiny): W1 in bf16 for the MXU; w2 as an f32 column
    # with the GELU 0.5 folded in; biases stay f32.
    w1_16 = w1_t.astype(jnp.bfloat16)
    w2_col = (0.5 * w2_t).reshape(HID, 1).astype(jnp.float32)
    b1_2d = b1.reshape(1, HID).astype(jnp.float32)
    b2_2d = b2.reshape(1, 1).astype(jnp.float32)

    cost = pl.CostEstimate(
        # 2*B*IN*HID (layer 1) + ~10 flops/elem GELU chain + 2*B*HID (layer 2).
        flops=2 * Bp * IN * HID + 10 * Bp * HID + 2 * Bp * HID,
        transcendentals=Bp * HID,  # erf lowers to a multi-op polynomial; advisory
        bytes_accessed=(x.size * 4 + w1_16.size * 2 + w2_col.size * 4
                        + b1_2d.size * 4 + b2_2d.size * 4 + Bp * 4),
    )

    out = pl.pallas_call(
        functools.partial(_mlp_kernel, compute_dtype=compute_dtype),
        out_shape=jax.ShapeDtypeStruct((Bp, 1), jnp.float32),
        grid_spec=pltpu.PrefetchScalarGridSpec(
            num_scalar_prefetch=0,
            grid=(grid_b,),
            in_specs=[
                pl.BlockSpec((block_b, IN), lambda i: (i, 0)),   # x tile (f32)
                pl.BlockSpec((IN, HID), lambda i: (0, 0)),       # W1^T (resident)
                pl.BlockSpec((1, HID), lambda i: (0, 0)),        # b1
                pl.BlockSpec((HID, 1), lambda i: (0, 0)),        # 0.5 * W2 column
                pl.BlockSpec((1, 1), lambda i: (0, 0)),          # b2
            ],
            out_specs=pl.BlockSpec((block_b, 1), lambda i: (i, 0)),
        ),
        compiler_params=pltpu.CompilerParams(
            dimension_semantics=("parallel",),
            vmem_limit_bytes=48 * 1024 * 1024,   # fits block_b=8192 on v7x's 64 MiB
        ),
        cost_estimate=cost,
    )(x, w1_16, b1_2d, w2_col, b2_2d)

    return out[:B]


def _reference(x, w1_t, b1, w2_t, b2):
    h = x @ w1_t + b1.reshape(1, -1)
    h = jax.nn.gelu(h, approximate=False)   # exact erf GELU, like torch default
    return h @ w2_t + b2.reshape(1, 1)


if __name__ == "__main__":
    # Small shapes consistent with the module: batch=16, input_size=32, hidden=128.
    B, IN, HID = 16, 32, 128

    key = jax.random.PRNGKey(0)
    kx, kw1, kb1, kw2, kb2 = jax.random.split(key, 5)

    x = jax.random.normal(kx, (B, IN), dtype=jnp.float32)

    # Deterministic nn.Linear-style uniform init (torch layout [out, in]).
    lim1 = 1.0 / (IN ** 0.5)
    w1 = jax.random.uniform(kw1, (HID, IN), jnp.float32, -lim1, lim1)
    b1 = jax.random.uniform(kb1, (HID,), jnp.float32, -lim1, lim1)
    lim2 = 1.0 / (HID ** 0.5)
    w2 = jax.random.uniform(kw2, (1, HID), jnp.float32, -lim2, lim2)
    b2 = jax.random.uniform(kb2, (1,), jnp.float32, -lim2, lim2)

    # Pre-transpose weights to [in, out] for the kernel.
    w1_t = w1.T
    w2_t = w2.T

    out = mlp_forward(x, w1_t, b1, w2_t, b2)
    out = jax.block_until_ready(out)

    ref = _reference(x, w1_t, b1, w2_t, b2)
    assert out.shape == (B, 1)
    # bf16 MXU inputs (and bf16 GELU on v6e/v7x) vs. f32 reference.
    assert jnp.allclose(out, ref, atol=5e-2, rtol=5e-2), (
        f"max abs err {jnp.max(jnp.abs(out - ref))}"
    )

    print("KERNEL_OK")
</pallas_src>

<mosaic_0001>
module attributes {stable_mosaic.version = 11 : i64} {
  func.func @_mlp_kernel(%arg0: i32, %arg1: memref<128x32xf32, #tpu.memory_space<vmem>>, %arg2: memref<32x128xbf16, #tpu.memory_space<vmem>>, %arg3: memref<1x128xf32, #tpu.memory_space<vmem>>, %arg4: memref<128x1xf32, #tpu.memory_space<vmem>>, %arg5: memref<1x1xf32, #tpu.memory_space<vmem>>, %arg6: memref<128x1xf32, #tpu.memory_space<vmem>>) attributes {dimension_semantics = [#tpu.dimension_semantics<parallel>], iteration_bounds = array<i64: 1>, scalar_prefetch = 0 : i64, scratch_operands = 0 : i64, tpu.core_type = #tpu.core_type<tc>, window_params = [{transform_indices = @transform_0, window_bounds = array<i64: 128, 32>}, {pipeline_mode = #tpu.pipeline_mode<synchronous>, transform_indices = @transform_1, window_bounds = array<i64: 32, 128>}, {pipeline_mode = #tpu.pipeline_mode<synchronous>, transform_indices = @transform_2, window_bounds = array<i64: 1, 128>}, {pipeline_mode = #tpu.pipeline_mode<synchronous>, transform_indices = @transform_3, window_bounds = array<i64: 128, 1>}, {pipeline_mode = #tpu.pipeline_mode<synchronous>, transform_indices = @transform_4, window_bounds = array<i64: 1, 1>}, {transform_indices = @transform_5, window_bounds = array<i64: 128, 1>}]} {
    %c0 = arith.constant 0 : index
    %c0_0 = arith.constant 0 : index
    %0 = vector.load %arg1[%c0, %c0_0] : memref<128x32xf32, #tpu.memory_space<vmem>>, vector<128x32xf32>
    %1 = arith.truncf %0 : vector<128x32xf32> to vector<128x32xbf16>
    %c0_1 = arith.constant 0 : index
    %c0_2 = arith.constant 0 : index
    %2 = vector.load %arg2[%c0_1, %c0_2] : memref<32x128xbf16, #tpu.memory_space<vmem>>, vector<32x128xbf16>
    %cst = arith.constant dense<0.000000e+00> : vector<128x128xf32>
    %3 = tpu.matmul %1, %2, %cst {dimension_numbers = #tpu.dot_dimension_numbers<[1], [0], [0], [1], [0, 0, 1, 1], [], []>} : vector<128x32xbf16>, vector<32x128xbf16>, vector<128x128xf32> -> vector<128x128xf32>
    %c0_3 = arith.constant 0 : index
    %c0_4 = arith.constant 0 : index
    %4 = vector.load %arg3[%c0_3, %c0_4] : memref<1x128xf32, #tpu.memory_space<vmem>>, vector<1x128xf32>
    %5 = vector.broadcast %4 : vector<1x128xf32> to vector<128x128xf32>
    %6 = arith.addf %3, %5 : vector<128x128xf32>
    %cst_5 = arith.constant 0.707106769 : f32
    %7 = vector.broadcast %cst_5 : f32 to vector<128x128xf32>
    %8 = arith.mulf %6, %7 : vector<128x128xf32>
    %9 = math.erf %8 : vector<128x128xf32>
    %cst_6 = arith.constant 1.000000e+00 : f32
    %10 = vector.broadcast %cst_6 : f32 to vector<128x128xf32>
    %11 = arith.addf %10, %9 : vector<128x128xf32>
    %12 = arith.mulf %6, %11 : vector<128x128xf32>
    %c0_7 = arith.constant 0 : index
    %c0_8 = arith.constant 0 : index
    %13 = vector.load %arg4[%c0_7, %c0_8] : memref<128x1xf32, #tpu.memory_space<vmem>>, vector<128x1xf32>
    %cst_9 = arith.constant dense<0.000000e+00> : vector<128x1xf32>
    %14 = tpu.matmul %12, %13, %cst_9 {dimension_numbers = #tpu.dot_dimension_numbers<[1], [0], [0], [1], [0, 0, 1, 1], [], []>} : vector<128x128xf32>, vector<128x1xf32>, vector<128x1xf32> -> vector<128x1xf32>
    %c0_10 = arith.constant 0 : index
    %c0_11 = arith.constant 0 : index
    %15 = vector.load %arg5[%c0_10, %c0_11] : memref<1x1xf32, #tpu.memory_space<vmem>>, vector<1x1xf32>
    %16 = vector.broadcast %15 : vector<1x1xf32> to vector<128x1xf32>
    %17 = arith.addf %14, %16 : vector<128x1xf32>
    %c0_12 = arith.constant 0 : index
    %c0_13 = arith.constant 0 : index
    %18 = vector.load %arg6[%c0_12, %c0_13] : memref<128x1xf32, #tpu.memory_space<vmem>>, vector<128x1xf32>
    tpu.vector_store %arg6[%c0_12, %c0_13], %17 {strides = array<i32>} : memref<128x1xf32, #tpu.memory_space<vmem>>, vector<128x1xf32>,
    return
  }
  func.func @transform_0(%arg0: i32) -> (i32, i32) {
    %c0_i32 = arith.constant 0 : i32
    %c0_i32_0 = arith.constant 0 : i32
    return %arg0, %c0_i32 : i32, i32
  }
  func.func @transform_1(%arg0: i32) -> (i32, i32) {
    %c0_i32 = arith.constant 0 : i32
    %c0_i32_0 = arith.constant 0 : i32
    %c0_i32_1 = arith.constant 0 : i32
    return %c0_i32, %c0_i32_0 : i32, i32
  }
  func.func @transform_2(%arg0: i32) -> (i32, i32) {
    %c0_i32 = arith.constant 0 : i32
    %c0_i32_0 = arith.constant 0 : i32
    %c0_i32_1 = arith.constant 0 : i32
    return %c0_i32, %c0_i32_0 : i32, i32
  }
  func.func @transform_3(%arg0: i32) -> (i32, i32) {
    %c0_i32 = arith.constant 0 : i32
    %c0_i32_0 = arith.constant 0 : i32
    %c0_i32_1 = arith.constant 0 : i32
    return %c0_i32, %c0_i32_0 : i32, i32
  }
  func.func @transform_4(%arg0: i32) -> (i32, i32) {
    %c0_i32 = arith.constant 0 : i32
    %c0_i32_0 = arith.constant 0 : i32
    %c0_i32_1 = arith.constant 0 : i32
    return %c0_i32, %c0_i32_0 : i32, i32
  }
  func.func @transform_5(%arg0: i32) -> (i32, i32) {
    %c0_i32 = arith.constant 0 : i32
    %c0_i32_0 = arith.constant 0 : i32
    return %arg0, %c0_i32 : i32, i32
  }
}

</mosaic_0001>

<llo_original>
// kernel: mlp_forward.1
$region0: #{mlp_forward.1}
  #allocation0 [shape = 'u32[]', space=smem, size = 0x4, offset = 0x4, fixed_abs, tag = 'smem constant byte address 0x4 - core index']
  #allocation1 [shape = 'u32[72,128]{1,0:T(1,128)}', space=vmem, size = 0x9000, scoped, tag = 'internal scratch']
  #allocation2 [shape = 'f32[1,1]{1,0:T(1,128)S(1)}', space=vmem, size = 0x200, scoped, tag = 'scoped memory for mlp_forward.1']
  %s0 = inlined_call_operand.vmem [shape: f32[128,32], index: 0, kind: input, shape index: {}]
  %s1 = inlined_call_operand.vmem [shape: bf16[32,128], index: 1, kind: input, shape index: {}]
  %s2 = inlined_call_operand.vmem [shape: f32[1,128], index: 2, kind: input, shape index: {}]
  %s3 = inlined_call_operand.vmem [shape: f32[128,1], index: 3, kind: input, shape index: {}]
  %s4 = inlined_call_operand.<no memory space> [shape: f32[1,1], index: 4, kind: input, shape index: {}]
  %s5 = inlined_call_operand.vmem [shape: f32[128,1], index: 5, kind: output, shape index: {}]
  %s6 = sld [smem:[#allocation0]]
  $region30: #{mlp_forward.1} parent=0
    _
  %s8 = ssub.s32 1, %s6
  %s9 = scalar_select 0, %s8, %s6
  %v10 = vstv %s4
  %11 = vst [vmem:[#allocation2] sm:$0x1] %v10
  // Predicated region
  $region2: #{mlp_forward.1} parent=0 // pred_check
    _
  $region3: #{mlp_forward.1} parent=0 // pred_check_branch
    %13 = sbr.rel (0) target = $region5
  $region4: #{mlp_forward.1} parent=0 // pred_region
    _
  $region5: #{mlp_forward.1} parent=0 // pred_fallthru
    _
  // Predicated region
  $region6: #{mlp_forward.1} parent=0 // pred_check
    _
  $region7: #{mlp_forward.1} parent=0 // pred_check_branch
    %15 = sbr.rel (0) target = $region9
  $region8: #{mlp_forward.1} parent=0 // pred_region
    _
  $region9: #{mlp_forward.1} parent=0 // pred_fallthru
    _
  // Predicated region
  $region10: #{mlp_forward.1} parent=0 // pred_check
    _
  $region11: #{mlp_forward.1} parent=0 // pred_check_branch
    %17 = sbr.rel (0) target = $region13
  $region12: #{mlp_forward.1} parent=0 // pred_region
    _
  $region13: #{mlp_forward.1} parent=0 // pred_fallthru
    _
  // Predicated region
  $region14: #{mlp_forward.1} parent=0 // pred_check
    _
  $region15: #{mlp_forward.1} parent=0 // pred_check_branch
    %19 = sbr.rel (0) target = $region17
  $region16: #{mlp_forward.1} parent=0 // pred_region
    _
  $region17: #{mlp_forward.1} parent=0 // pred_fallthru
    _
  // Predicated region
  $region18: #{mlp_forward.1} parent=0 // pred_check
    _
  $region19: #{mlp_forward.1} parent=0 // pred_check_branch
    %21 = sbr.rel (0) target = $region21
  $region20: #{mlp_forward.1} parent=0 // pred_region
    _
  $region21: #{mlp_forward.1} parent=0 // pred_fallthru
    _
  %v23 = vld [vmem:[%s0] sm:$0xff]
  %v24 = vld [vmem:[%s0 + $0x8] sm:$0xff]
  %v25 = vld [vmem:[%s0 + $0x10] sm:$0xff]
  %v26 = vld [vmem:[%s0 + $0x18] sm:$0xff]
  %v27 = vld [vmem:[%s0 + $0x20] sm:$0xff]
  %v28 = vld [vmem:[%s0 + $0x28] sm:$0xff]
  %v29 = vld [vmem:[%s0 + $0x30] sm:$0xff]
  %v30 = vld [vmem:[%s0 + $0x38] sm:$0xff]
  %v31 = vld [vmem:[%s0 + $0x40] sm:$0xff]
  %v32 = vld [vmem:[%s0 + $0x48] sm:$0xff]
  %v33 = vld [vmem:[%s0 + $0x50] sm:$0xff]
  %v34 = vld [vmem:[%s0 + $0x58] sm:$0xff]
  %v35 = vld [vmem:[%s0 + $0x60] sm:$0xff]
  %v36 = vld [vmem:[%s0 + $0x68] sm:$0xff]
  %v37 = vld [vmem:[%s0 + $0x70] sm:$0xff]
  %v38 = vld [vmem:[%s0 + $0x78] sm:$0xff]
  %v39 = vpack.c.bf16 %v24, %v23
  %v40 = vpack.c.bf16 %v26, %v25
  %v41 = vpack.c.bf16 %v28, %v27
  %v42 = vpack.c.bf16 %v30, %v29
  %v43 = vpack.c.bf16 %v32, %v31
  %v44 = vpack.c.bf16 %v34, %v33
  %v45 = vpack.c.bf16 %v36, %v35
  %v46 = vpack.c.bf16 %v38, %v37
  %v47 = vld [vmem:[%s1] sm:$0xf]
  %v48 = vld [vmem:[%s1 + $0x4] sm:$0xf]
  %v49 = vld [vmem:[%s1 + $0x8] sm:$0xf]
  %v50 = vld [vmem:[%s1 + $0xc] sm:$0xf]
  %v51 = vld [vmem:[%s2] sm:$0x1]
  %v53 = vperm.slane %v51, 0
  %v59 = vunpack.c.l.b16 %v47
  %v60 = vunpack.c.l.b16 %v48
  %v61 = vunpack.c.l.b16 %v49
  %v62 = vunpack.c.l.b16 %v50
  %v63 = vpack.c.b16 %v60, %v59
  %v64 = vpack.c.b16 %v62, %v61
  %vm67 = vcmask 261120
  %v69 = vsel %vm67, %v39, 0
  %v72 = vsel %vm67, %v40, 0
  %v75 = vsel %vm67, %v41, 0
  %v78 = vsel %vm67, %v42, 0
  %v81 = vsel %vm67, %v43, 0
  %v84 = vsel %vm67, %v44, 0
  %v87 = vsel %vm67, %v45, 0
  %v90 = vsel %vm67, %v46, 0
  %92 = vmatpush.bf16.msra.mxu0 0
  %93 = vmatpush.bf16.msra.mxu0 0
  %94 = vmatpush.bf16.msra.mxu0 0
  %95 = vmatpush.bf16.msra.mxu0 0
  %96 = vmatpush.bf16.msra.mxu0 0
  %97 = vmatpush.bf16.msra.mxu0 0
  %98 = vmatpush.bf16.msra.mxu0 %v64
  %99 = vmatpush.bf16.msra.mxu0 %v63
  %100 = vmatmul.bf16.gmra.mxu0 %v69
  %v101 = vpop.f32.mrf.mxu0
  %v102 = vadd.f32 %v53, %v101
  %v103 = vpop.f32.mrf.mxu0
  %v104 = vadd.f32 %v53, %v103
  %105 = vmatmul.bf16.gmra.mxu0 %v72
  %v106 = vpop.f32.mrf.mxu0
  %v107 = vadd.f32 %v53, %v106
  %v108 = vpop.f32.mrf.mxu0
  %v109 = vadd.f32 %v53, %v108
  %110 = vmatmul.bf16.gmra.mxu0 %v75
  %v111 = vpop.f32.mrf.mxu0
  %v112 = vadd.f32 %v53, %v111
  %v113 = vpop.f32.mrf.mxu0
  %v114 = vadd.f32 %v53, %v113
  %115 = vmatmul.bf16.gmra.mxu0 %v78
  %v116 = vpop.f32.mrf.mxu0
  %v117 = vadd.f32 %v53, %v116
  %v118 = vpop.f32.mrf.mxu0
  %v119 = vadd.f32 %v53, %v118
  %120 = vmatmul.bf16.gmra.mxu0 %v81
  %v121 = vpop.f32.mrf.mxu0
  %v122 = vadd.f32 %v53, %v121
  %v123 = vpop.f32.mrf.mxu0
  %v124 = vadd.f32 %v53, %v123
  %125 = vmatmul.bf16.gmra.mxu0 %v84
  %v126 = vpop.f32.mrf.mxu0
  %v127 = vadd.f32 %v53, %v126
  %v128 = vpop.f32.mrf.mxu0
  %v129 = vadd.f32 %v53, %v128
  %130 = vmatmul.bf16.gmra.mxu0 %v87
  %v131 = vpop.f32.mrf.mxu0
  %v132 = vadd.f32 %v53, %v131
  %v133 = vpop.f32.mrf.mxu0
  %v134 = vadd.f32 %v53, %v133
  %135 = vmatmul.bf16.gmra.mxu0 %v90
  %v136 = vpop.f32.mrf.mxu0
  %v137 = vadd.f32 %v53, %v136
  %v138 = vpop.f32.mrf.mxu0
  %v139 = vadd.f32 %v53, %v138
  %140 = vdwg.mxu0
  %v141 = vmul.f32 %v102, 0.70710677
  %v142 = vmul.f32 %v104, 0.70710677
  %v143 = vmul.f32 %v107, 0.70710677
  %v144 = vmul.f32 %v109, 0.70710677
  %v145 = vmul.f32 %v112, 0.70710677
  %v146 = vmul.f32 %v114, 0.70710677
  %v147 = vmul.f32 %v117, 0.70710677
  %v148 = vmul.f32 %v119, 0.70710677
  %v149 = vmul.f32 %v122, 0.70710677
  %v150 = vmul.f32 %v124, 0.70710677
  %v151 = vmul.f32 %v127, 0.70710677
  %v152 = vmul.f32 %v129, 0.70710677
  %v153 = vmul.f32 %v132, 0.70710677
  %v154 = vmul.f32 %v134, 0.70710677
  %v155 = vmul.f32 %v137, 0.70710677
  %v156 = vmul.f32 %v139, 0.70710677
  %v157 = vmul.f32 %v141, %v141
  %v158 = vmin.f32 16.0, %v157
  %v159 = vmul.f32 %v158, 2.1237322e-06
  %v160 = vadd.f32 %v159, 0.00028619796
  %v161 = vmul.f32 %v158, %v160
  %v162 = vadd.f32 %v161, 0.0036580483
  %v163 = vmul.f32 %v158, %v162
  %v164 = vadd.f32 %v163, 0.05243302
  %v165 = vmul.f32 %v158, %v164
  %v166 = vadd.f32 %v165, 0.18741608
  %v167 = vmul.f32 %v158, %v166
  %v168 = vadd.f32 %v167, 1.1283791
  %v169 = vmul.f32 %v141, %v168
  %v170 = vmul.f32 %v158, 3.8918573e-05
  %v171 = vadd.f32 %v170, 0.001143296
  %v172 = vmul.f32 %v158, %v171
  %v173 = vadd.f32 %v172, 0.014752088
  %v174 = vmul.f32 %v158, %v173
  %v175 = vadd.f32 %v174, 0.112945676
  %v176 = vmul.f32 %v158, %v175
  %v177 = vadd.f32 %v176, 0.4994258
  %v178 = vmul.f32 %v158, %v177
  %v179 = vadd.f32 %v178, 1.0
  %v180 = vrcp.pop %v179
  %v181 = vmul.f32 %v179, %v180
  %v182 = vsub.f32 1.0, %v181
  %v183 = vmul.f32 %v180, %v182
  %v184 = vadd.f32 %v180, %v183
  %vm185 = vweird.f32 %v179
  %vm186 = vweird.f32 %v180
  %vm187 = vmor %vm185, %vm186
  %v188 = vsel %vm187, %v180, %v184
  %v189 = vand.u32 2147483647, %v179
  %vm190 = vcmp.eq.f32.partialorder %v189, 8.507059e+37
  %v191 = vand.u32 %v179, 2147483648
  %v192 = vor.u32 1.1754944e-38, %v191
  %v193 = vsel %vm190, %v192, %v188
  %v194 = vmul.f32 %v169, %v193
  %v195 = vmin.f32 %v194, 1.0
  %v196 = vmax.f32 %v195, -1.0
  %v197 = vmul.f32 %v142, %v142
  %v198 = vmin.f32 16.0, %v197
  %v199 = vmul.f32 %v198, 2.1237322e-06
  %v200 = vadd.f32 %v199, 0.00028619796
  %v201 = vmul.f32 %v198, %v200
  %v202 = vadd.f32 %v201, 0.0036580483
  %v203 = vmul.f32 %v198, %v202
  %v204 = vadd.f32 %v203, 0.05243302
  %v205 = vmul.f32 %v198, %v204
  %v206 = vadd.f32 %v205, 0.18741608
  %v207 = vmul.f32 %v198, %v206
  %v208 = vadd.f32 %v207, 1.1283791
  %v209 = vmul.f32 %v142, %v208
  %v210 = vmul.f32 %v198, 3.8918573e-05
  %v211 = vadd.f32 %v210, 0.001143296
  %v212 = vmul.f32 %v198, %v211
  %v213 = vadd.f32 %v212, 0.014752088
  %v214 = vmul.f32 %v198, %v213
  %v215 = vadd.f32 %v214, 0.112945676
  %v216 = vmul.f32 %v198, %v215
  %v217 = vadd.f32 %v216, 0.4994258
  %v218 = vmul.f32 %v198, %v217
  %v219 = vadd.f32 %v218, 1.0
  %v220 = vrcp.pop %v219
  %v221 = vmul.f32 %v219, %v220
  %v222 = vsub.f32 1.0, %v221
  %v223 = vmul.f32 %v220, %v222
  %v224 = vadd.f32 %v220, %v223
  %vm225 = vweird.f32 %v219
  %vm226 = vweird.f32 %v220
  %vm227 = vmor %vm225, %vm226
  %v228 = vsel %vm227, %v220, %v224
  %v229 = vand.u32 2147483647, %v219
  %vm230 = vcmp.eq.f32.partialorder %v229, 8.507059e+37
  %v231 = vand.u32 %v219, 2147483648
  %v232 = vor.u32 1.1754944e-38, %v231
  %v233 = vsel %vm230, %v232, %v228
  %v234 = vmul.f32 %v209, %v233
  %v235 = vmin.f32 %v234, 1.0
  %v236 = vmax.f32 %v235, -1.0
  %v237 = vmul.f32 %v143, %v143
  %v238 = vmin.f32 16.0, %v237
  %v239 = vmul.f32 %v238, 2.1237322e-06
  %v240 = vadd.f32 %v239, 0.00028619796
  %v241 = vmul.f32 %v238, %v240
  %v242 = vadd.f32 %v241, 0.0036580483
  %v243 = vmul.f32 %v238, %v242
  %v244 = vadd.f32 %v243, 0.05243302
  %v245 = vmul.f32 %v238, %v244
  %v246 = vadd.f32 %v245, 0.18741608
  %v247 = vmul.f32 %v238, %v246
  %v248 = vadd.f32 %v247, 1.1283791
  %v249 = vmul.f32 %v143, %v248
  %v250 = vmul.f32 %v238, 3.8918573e-05
  %v251 = vadd.f32 %v250, 0.001143296
  %v252 = vmul.f32 %v238, %v251
  %v253 = vadd.f32 %v252, 0.014752088
  %v254 = vmul.f32 %v238, %v253
  %v255 = vadd.f32 %v254, 0.112945676
  %v256 = vmul.f32 %v238, %v255
  %v257 = vadd.f32 %v256, 0.4994258
  %v258 = vmul.f32 %v238, %v257
  %v259 = vadd.f32 %v258, 1.0
  %v260 = vrcp.pop %v259
  %v261 = vmul.f32 %v259, %v260
  %v262 = vsub.f32 1.0, %v261
  %v263 = vmul.f32 %v260, %v262
  %v264 = vadd.f32 %v260, %v263
  %vm265 = vweird.f32 %v259
  %vm266 = vweird.f32 %v260
  %vm267 = vmor %vm265, %vm266
  %v268 = vsel %vm267, %v260, %v264
  %v269 = vand.u32 2147483647, %v259
  %vm270 = vcmp.eq.f32.partialorder %v269, 8.507059e+37
  %v271 = vand.u32 %v259, 2147483648
  %v272 = vor.u32 1.1754944e-38, %v271
  %v273 = vsel %vm270, %v272, %v268
  %v274 = vmul.f32 %v249, %v273
  %v275 = vmin.f32 %v274, 1.0
  %v276 = vmax.f32 %v275, -1.0
  %v277 = vmul.f32 %v144, %v144
  %v278 = vmin.f32 16.0, %v277
  %v279 = vmul.f32 %v278, 2.1237322e-06
  %v280 = vadd.f32 %v279, 0.00028619796
  %v281 = vmul.f32 %v278, %v280
  %v282 = vadd.f32 %v281, 0.0036580483
  %v283 = vmul.f32 %v278, %v282
  %v284 = vadd.f32 %v283, 0.05243302
  %v285 = vmul.f32 %v278, %v284
  %v286 = vadd.f32 %v285, 0.18741608
  %v287 = vmul.f32 %v278, %v286
  %v288 = vadd.f32 %v287, 1.1283791
  %v289 = vmul.f32 %v144, %v288
  %v290 = vmul.f32 %v278, 3.8918573e-05
  %v291 = vadd.f32 %v290, 0.001143296
  %v292 = vmul.f32 %v278, %v291
  %v293 = vadd.f32 %v292, 0.014752088
  %v294 = vmul.f32 %v278, %v293
  %v295 = vadd.f32 %v294, 0.112945676
  %v296 = vmul.f32 %v278, %v295
  %v297 = vadd.f32 %v296, 0.4994258
  %v298 = vmul.f32 %v278, %v297
  %v299 = vadd.f32 %v298, 1.0
  %v300 = vrcp.pop %v299
  %v301 = vmul.f32 %v299, %v300
  %v302 = vsub.f32 1.0, %v301
  %v303 = vmul.f32 %v300, %v302
  %v304 = vadd.f32 %v300, %v303
  %vm305 = vweird.f32 %v299
  %vm306 = vweird.f32 %v300
  %vm307 = vmor %vm305, %vm306
  %v308 = vsel %vm307, %v300, %v304
  %v309 = vand.u32 2147483647, %v299
  %vm310 = vcmp.eq.f32.partialorder %v309, 8.507059e+37
  %v311 = vand.u32 %v299, 2147483648
  %v312 = vor.u32 1.1754944e-38, %v311
  %v313 = vsel %vm310, %v312, %v308
  %v314 = vmul.f32 %v289, %v313
  %v315 = vmin.f32 %v314, 1.0
  %v316 = vmax.f32 %v315, -1.0
  %v317 = vmul.f32 %v145, %v145
  %v318 = vmin.f32 16.0, %v317
  %v319 = vmul.f32 %v318, 2.1237322e-06
  %v320 = vadd.f32 %v319, 0.00028619796
  %v321 = vmul.f32 %v318, %v320
  %v322 = vadd.f32 %v321, 0.0036580483
  %v323 = vmul.f32 %v318, %v322
  %v324 = vadd.f32 %v323, 0.05243302
  %v325 = vmul.f32 %v318, %v324
  %v326 = vadd.f32 %v325, 0.18741608
  %v327 = vmul.f32 %v318, %v326
  %v328 = vadd.f32 %v327, 1.1283791
  %v329 = vmul.f32 %v145, %v328
  %v330 = vmul.f32 %v318, 3.8918573e-05
  %v331 = vadd.f32 %v330, 0.001143296
  %v332 = vmul.f32 %v318, %v331
  %v333 = vadd.f32 %v332, 0.014752088
  %v334 = vmul.f32 %v318, %v333
  %v335 = vadd.f32 %v334, 0.112945676
  %v336 = vmul.f32 %v318, %v335
  %v337 = vadd.f32 %v336, 0.4994258
  %v338 = vmul.f32 %v318, %v337
  %v339 = vadd.f32 %v338, 1.0
  %v340 = vrcp.pop %v339
  %v341 = vmul.f32 %v339, %v340
  %v342 = vsub.f32 1.0, %v341
  %v343 = vmul.f32 %v340, %v342
  %v344 = vadd.f32 %v340, %v343
  %vm345 = vweird.f32 %v339
  %vm346 = vweird.f32 %v340
  %vm347 = vmor %vm345, %vm346
  %v348 = vsel %vm347, %v340, %v344
  %v349 = vand.u32 2147483647, %v339
  %vm350 = vcmp.eq.f32.partialorder %v349, 8.507059e+37
  %v351 = vand.u32 %v339, 2147483648
  %v352 = vor.u32 1.1754944e-38, %v351
  %v353 = vsel %vm350, %v352, %v348
  %v354 = vmul.f32 %v329, %v353
  %v355 = vmin.f32 %v354, 1.0
  %v356 = vmax.f32 %v355, -1.0
  %v357 = vmul.f32 %v146, %v146
  %v358 = vmin.f32 16.0, %v357
  %v359 = vmul.f32 %v358, 2.1237322e-06
  %v360 = vadd.f32 %v359, 0.00028619796
  %v361 = vmul.f32 %v358, %v360
  %v362 = vadd.f32 %v361, 0.0036580483
  %v363 = vmul.f32 %v358, %v362
  %v364 = vadd.f32 %v363, 0.05243302
  %v365 = vmul.f32 %v358, %v364
  %v366 = vadd.f32 %v365, 0.18741608
  %v367 = vmul.f32 %v358, %v366
  %v368 = vadd.f32 %v367, 1.1283791
  %v369 = vmul.f32 %v146, %v368
  %v370 = vmul.f32 %v358, 3.8918573e-05
  %v371 = vadd.f32 %v370, 0.001143296
  %v372 = vmul.f32 %v358, %v371
  %v373 = vadd.f32 %v372, 0.014752088
  %v374 = vmul.f32 %v358, %v373
  %v375 = vadd.f32 %v374, 0.112945676
  %v376 = vmul.f32 %v358, %v375
  %v377 = vadd.f32 %v376, 0.4994258
  %v378 = vmul.f32 %v358, %v377
  %v379 = vadd.f32 %v378, 1.0
  %v380 = vrcp.pop %v379
  %v381 = vmul.f32 %v379, %v380
  %v382 = vsub.f32 1.0, %v381
  %v383 = vmul.f32 %v380, %v382
  %v384 = vadd.f32 %v380, %v383
  %vm385 = vweird.f32 %v379
  %vm386 = vweird.f32 %v380
  %vm387 = vmor %vm385, %vm386
  %v388 = vsel %vm387, %v380, %v384
  %v389 = vand.u32 2147483647, %v379
  %vm390 = vcmp.eq.f32.partialorder %v389, 8.507059e+37
  %v391 = vand.u32 %v379, 2147483648
  %v392 = vor.u32 1.1754944e-38, %v391
  %v393 = vsel %vm390, %v392, %v388
  %v394 = vmul.f32 %v369, %v393
  %v395 = vmin.f32 %v394, 1.0
  %v396 = vmax.f32 %v395, -1.0
  %v397 = vmul.f32 %v147, %v147
  %v398 = vmin.f32 16.0, %v397
  %v399 = vmul.f32 %v398, 2.1237322e-06
  %v400 = vadd.f32 %v399, 0.00028619796
  %v401 = vmul.f32 %v398, %v400
  %v402 = vadd.f32 %v401, 0.0036580483
  %v403 = vmul.f32 %v398, %v402
  %v404 = vadd.f32 %v403, 0.05243302
  %v405 = vmul.f32 %v398, %v404
  %v406 = vadd.f32 %v405, 0.18741608
  %v407 = vmul.f32 %v398, %v406
  %v408 = vadd.f32 %v407, 1.1283791
  %v409 = vmul.f32 %v147, %v408
  %v410 = vmul.f32 %v398, 3.8918573e-05
  %v411 = vadd.f32 %v410, 0.001143296
  %v412 = vmul.f32 %v398, %v411
  %v413 = vadd.f32 %v412, 0.014752088
  %v414 = vmul.f32 %v398, %v413
  %v415 = vadd.f32 %v414, 0.112945676
  %v416 = vmul.f32 %v398, %v415
  %v417 = vadd.f32 %v416, 0.4994258
  %v418 = vmul.f32 %v398, %v417
  %v419 = vadd.f32 %v418, 1.0
  %v420 = vrcp.pop %v419
  %v421 = vmul.f32 %v419, %v420
  %v422 = vsub.f32 1.0, %v421
  %v423 = vmul.f32 %v420, %v422
  %v424 = vadd.f32 %v420, %v423
  %vm425 = vweird.f32 %v419
  %vm426 = vweird.f32 %v420
  %vm427 = vmor %vm425, %vm426
  %v428 = vsel %vm427, %v420, %v424
  %v429 = vand.u32 2147483647, %v419
  %vm430 = vcmp.eq.f32.partialorder %v429, 8.507059e+37
  %v431 = vand.u32 %v419, 2147483648
  %v432 = vor.u32 1.1754944e-38, %v431
  %v433 = vsel %vm430, %v432, %v428
  %v434 = vmul.f32 %v409, %v433
  %v435 = vmin.f32 %v434, 1.0
  %v436 = vmax.f32 %v435, -1.0
  %v437 = vmul.f32 %v148, %v148
  %v438 = vmin.f32 16.0, %v437
  %v439 = vmul.f32 %v438, 2.1237322e-06
  %v440 = vadd.f32 %v439, 0.00028619796
  %v441 = vmul.f32 %v438, %v440
  %v442 = vadd.f32 %v441, 0.0036580483
  %v443 = vmul.f32 %v438, %v442
  %v444 = vadd.f32 %v443, 0.05243302
  %v445 = vmul.f32 %v438, %v444
  %v446 = vadd.f32 %v445, 0.18741608
  %v447 = vmul.f32 %v438, %v446
  %v448 = vadd.f32 %v447, 1.1283791
  %v449 = vmul.f32 %v148, %v448
  %v450 = vmul.f32 %v438, 3.8918573e-05
  %v451 = vadd.f32 %v450, 0.001143296
  %v452 = vmul.f32 %v438, %v451
  %v453 = vadd.f32 %v452, 0.014752088
  %v454 = vmul.f32 %v438, %v453
  %v455 = vadd.f32 %v454, 0.112945676
  %v456 = vmul.f32 %v438, %v455
  %v457 = vadd.f32 %v456, 0.4994258
  %v458 = vmul.f32 %v438, %v457
  %v459 = vadd.f32 %v458, 1.0
  %v460 = vrcp.pop %v459
  %v461 = vmul.f32 %v459, %v460
  %v462 = vsub.f32 1.0, %v461
  %v463 = vmul.f32 %v460, %v462
  %v464 = vadd.f32 %v460, %v463
  %vm465 = vweird.f32 %v459
  %vm466 = vweird.f32 %v460
  %vm467 = vmor %vm465, %vm466
  %v468 = vsel %vm467, %v460, %v464
  %v469 = vand.u32 2147483647, %v459
  %vm470 = vcmp.eq.f32.partialorder %v469, 8.507059e+37
  %v471 = vand.u32 %v459, 2147483648
  %v472 = vor.u32 1.1754944e-38, %v471
  %v473 = vsel %vm470, %v472, %v468
  %v474 = vmul.f32 %v449, %v473
  %v475 = vmin.f32 %v474, 1.0
  %v476 = vmax.f32 %v475, -1.0
  %v477 = vmul.f32 %v149, %v149
  %v478 = vmin.f32 16.0, %v477
  %v479 = vmul.f32 %v478, 2.1237322e-06
  %v480 = vadd.f32 %v479, 0.00028619796
  %v481 = vmul.f32 %v478, %v480
  %v482 = vadd.f32 %v481, 0.0036580483
  %v483 = vmul.f32 %v478, %v482
  %v484 = vadd.f32 %v483, 0.05243302
  %v485 = vmul.f32 %v478, %v484
  %v486 = vadd.f32 %v485, 0.18741608
  %v487 = vmul.f32 %v478, %v486
  %v488 = vadd.f32 %v487, 1.1283791
  %v489 = vmul.f32 %v149, %v488
  %v490 = vmul.f32 %v478, 3.8918573e-05
  %v491 = vadd.f32 %v490, 0.001143296
  %v492 = vmul.f32 %v478, %v491
  %v493 = vadd.f32 %v492, 0.014752088
  %v494 = vmul.f32 %v478, %v493
  %v495 = vadd.f32 %v494, 0.112945676
  %v496 = vmul.f32 %v478, %v495
  %v497 = vadd.f32 %v496, 0.4994258
  %v498 = vmul.f32 %v478, %v497
  %v499 = vadd.f32 %v498, 1.0
  %v500 = vrcp.pop %v499
  %v501 = vmul.f32 %v499, %v500
  %v502 = vsub.f32 1.0, %v501
  %v503 = vmul.f32 %v500, %v502
  %v504 = vadd.f32 %v500, %v503
  %vm505 = vweird.f32 %v499
  %vm506 = vweird.f32 %v500
  %vm507 = vmor %vm505, %vm506
  %v508 = vsel %vm507, %v500, %v504
  %v509 = vand.u32 2147483647, %v499
  %vm510 = vcmp.eq.f32.partialorder %v509, 8.507059e+37
  %v511 = vand.u32 %v499, 2147483648
  %v512 = vor.u32 1.1754944e-38, %v511
  %v513 = vsel %vm510, %v512, %v508
  %v514 = vmul.f32 %v489, %v513
  %v515 = vmin.f32 %v514, 1.0
  %v516 = vmax.f32 %v515, -1.0
  %v517 = vmul.f32 %v150, %v150
  %v518 = vmin.f32 16.0, %v517
  %v519 = vmul.f32 %v518, 2.1237322e-06
  %v520 = vadd.f32 %v519, 0.00028619796
  %v521 = vmul.f32 %v518, %v520
  %v522 = vadd.f32 %v521, 0.0036580483
  %v523 = vmul.f32 %v518, %v522
  %v524 = vadd.f32 %v523, 0.05243302
  %v525 = vmul.f32 %v518, %v524
  %v526 = vadd.f32 %v525, 0.18741608
  %v527 = vmul.f32 %v518, %v526
  %v528 = vadd.f32 %v527, 1.1283791
  %v529 = vmul.f32 %v150, %v528
  %v530 = vmul.f32 %v518, 3.8918573e-05
  %v531 = vadd.f32 %v530, 0.001143296
  %v532 = vmul.f32 %v518, %v531
  %v533 = vadd.f32 %v532, 0.014752088
  %v534 = vmul.f32 %v518, %v533
  %v535 = vadd.f32 %v534, 0.112945676
  %v536 = vmul.f32 %v518, %v535
  %v537 = vadd.f32 %v536, 0.4994258
  %v538 = vmul.f32 %v518, %v537
  %v539 = vadd.f32 %v538, 1.0
  %v540 = vrcp.pop %v539
  %v541 = vmul.f32 %v539, %v540
  %v542 = vsub.f32 1.0, %v541
  %v543 = vmul.f32 %v540, %v542
  %v544 = vadd.f32 %v540, %v543
  %vm545 = vweird.f32 %v539
  %vm546 = vweird.f32 %v540
  %vm547 = vmor %vm545, %vm546
  %v548 = vsel %vm547, %v540, %v544
  %v549 = vand.u32 2147483647, %v539
  %vm550 = vcmp.eq.f32.partialorder %v549, 8.507059e+37
  %v551 = vand.u32 %v539, 2147483648
  %v552 = vor.u32 1.1754944e-38, %v551
  %v553 = vsel %vm550, %v552, %v548
  %v554 = vmul.f32 %v529, %v553
  %v555 = vmin.f32 %v554, 1.0
  %v556 = vmax.f32 %v555, -1.0
  %v557 = vmul.f32 %v151, %v151
  %v558 = vmin.f32 16.0, %v557
  %v559 = vmul.f32 %v558, 2.1237322e-06
  %v560 = vadd.f32 %v559, 0.00028619796
  %v561 = vmul.f32 %v558, %v560
  %v562 = vadd.f32 %v561, 0.0036580483
  %v563 = vmul.f32 %v558, %v562
  %v564 = vadd.f32 %v563, 0.05243302
  %v565 = vmul.f32 %v558, %v564
  %v566 = vadd.f32 %v565, 0.18741608
  %v567 = vmul.f32 %v558, %v566
  %v568 = vadd.f32 %v567, 1.1283791
  %v569 = vmul.f32 %v151, %v568
  %v570 = vmul.f32 %v558, 3.8918573e-05
  %v571 = vadd.f32 %v570, 0.001143296
  %v572 = vmul.f32 %v558, %v571
  %v573 = vadd.f32 %v572, 0.014752088
  %v574 = vmul.f32 %v558, %v573
  %v575 = vadd.f32 %v574, 0.112945676
  %v576 = vmul.f32 %v558, %v575
  %v577 = vadd.f32 %v576, 0.4994258
  %v578 = vmul.f32 %v558, %v577
  %v579 = vadd.f32 %v578, 1.0
  %v580 = vrcp.pop %v579
  %v581 = vmul.f32 %v579, %v580
  %v582 = vsub.f32 1.0, %v581
  %v583 = vmul.f32 %v580, %v582
  %v584 = vadd.f32 %v580, %v583
  %vm585 = vweird.f32 %v579
  %vm586 = vweird.f32 %v580
  %vm587 = vmor %vm585, %vm586
  %v588 = vsel %vm587, %v580, %v584
  %v589 = vand.u32 2147483647, %v579
  %vm590 = vcmp.eq.f32.partialorder %v589, 8.507059e+37
  %v591 = vand.u32 %v579, 2147483648
  %v592 = vor.u32 1.1754944e-38, %v591
  %v593 = vsel %vm590, %v592, %v588
  %v594 = vmul.f32 %v569, %v593
  %v595 = vmin.f32 %v594, 1.0
  %v596 = vmax.f32 %v595, -1.0
  %v597 = vmul.f32 %v152, %v152
  %v598 = vmin.f32 16.0, %v597
  %v599 = vmul.f32 %v598, 2.1237322e-06
  %v600 = vadd.f32 %v599, 0.00028619796
  %v601 = vmul.f32 %v598, %v600
  %v602 = vadd.f32 %v601, 0.0036580483
  %v603 = vmul.f32 %v598, %v602
  %v604 = vadd.f32 %v603, 0.05243302
  %v605 = vmul.f32 %v598, %v604
  %v606 = vadd.f32 %v605, 0.18741608
  %v607 = vmul.f32 %v598, %v606
  %v608 = vadd.f32 %v607, 1.1283791
  %v609 = vmul.f32 %v152, %v608
  %v610 = vmul.f32 %v598, 3.8918573e-05
  %v611 = vadd.f32 %v610, 0.001143296
  %v612 = vmul.f32 %v598, %v611
  %v613 = vadd.f32 %v612, 0.014752088
  %v614 = vmul.f32 %v598, %v613
  %v615 = vadd.f32 %v614, 0.112945676
  %v616 = vmul.f32 %v598, %v615
  %v617 = vadd.f32 %v616, 0.4994258
  %v618 = vmul.f32 %v598, %v617
  %v619 = vadd.f32 %v618, 1.0
  %v620 = vrcp.pop %v619
  %v621 = vmul.f32 %v619, %v620
  %v622 = vsub.f32 1.0, %v621
  %v623 = vmul.f32 %v620, %v622
  %v624 = vadd.f32 %v620, %v623
  %vm625 = vweird.f32 %v619
  %vm626 = vweird.f32 %v620
  %vm627 = vmor %vm625, %vm626
  %v628 = vsel %vm627, %v620, %v624
  %v629 = vand.u32 2147483647, %v619
  %vm630 = vcmp.eq.f32.partialorder %v629, 8.507059e+37
  %v631 = vand.u32 %v619, 2147483648
  %v632 = vor.u32 1.1754944e-38, %v631
  %v633 = vsel %vm630, %v632, %v628
  %v634 = vmul.f32 %v609, %v633
  %v635 = vmin.f32 %v634, 1.0
  %v636 = vmax.f32 %v635, -1.0
  %v637 = vmul.f32 %v153, %v153
  %v638 = vmin.f32 16.0, %v637
  %v639 = vmul.f32 %v638, 2.1237322e-06
  %v640 = vadd.f32 %v639, 0.00028619796
  %v641 = vmul.f32 %v638, %v640
  %v642 = vadd.f32 %v641, 0.0036580483
  %v643 = vmul.f32 %v638, %v642
  %v644 = vadd.f32 %v643, 0.05243302
  %v645 = vmul.f32 %v638, %v644
  %v646 = vadd.f32 %v645, 0.18741608
  %v647 = vmul.f32 %v638, %v646
  %v648 = vadd.f32 %v647, 1.1283791
  %v649 = vmul.f32 %v153, %v648
  %v650 = vmul.f32 %v638, 3.8918573e-05
  %v651 = vadd.f32 %v650, 0.001143296
  %v652 = vmul.f32 %v638, %v651
  %v653 = vadd.f32 %v652, 0.014752088
  %v654 = vmul.f32 %v638, %v653
  %v655 = vadd.f32 %v654, 0.112945676
  %v656 = vmul.f32 %v638, %v655
  %v657 = vadd.f32 %v656, 0.4994258
  %v658 = vmul.f32 %v638, %v657
  %v659 = vadd.f32 %v658, 1.0
  %v660 = vrcp.pop %v659
  %v661 = vmul.f32 %v659, %v660
  %v662 = vsub.f32 1.0, %v661
  %v663 = vmul.f32 %v660, %v662
  %v664 = vadd.f32 %v660, %v663
  %vm665 = vweird.f32 %v659
  %vm666 = vweird.f32 %v660
  %vm667 = vmor %vm665, %vm666
  %v668 = vsel %vm667, %v660, %v664
  %v669 = vand.u32 2147483647, %v659
  %vm670 = vcmp.eq.f32.partialorder %v669, 8.507059e+37
  %v671 = vand.u32 %v659, 2147483648
  %v672 = vor.u32 1.1754944e-38, %v671
  %v673 = vsel %vm670, %v672, %v668
  %v674 = vmul.f32 %v649, %v673
  %v675 = vmin.f32 %v674, 1.0
  %v676 = vmax.f32 %v675, -1.0
  %v677 = vmul.f32 %v154, %v154
  %v678 = vmin.f32 16.0, %v677
  %v679 = vmul.f32 %v678, 2.1237322e-06
  %v680 = vadd.f32 %v679, 0.00028619796
  %v681 = vmul.f32 %v678, %v680
  %v682 = vadd.f32 %v681, 0.0036580483
  %v683 = vmul.f32 %v678, %v682
  %v684 = vadd.f32 %v683, 0.05243302
  %v685 = vmul.f32 %v678, %v684
  %v686 = vadd.f32 %v685, 0.18741608
  %v687 = vmul.f32 %v678, %v686
  %v688 = vadd.f32 %v687, 1.1283791
  %v689 = vmul.f32 %v154, %v688
  %v690 = vmul.f32 %v678, 3.8918573e-05
  %v691 = vadd.f32 %v690, 0.001143296
  %v692 = vmul.f32 %v678, %v691
  %v693 = vadd.f32 %v692, 0.014752088
  %v694 = vmul.f32 %v678, %v693
  %v695 = vadd.f32 %v694, 0.112945676
  %v696 = vmul.f32 %v678, %v695
  %v697 = vadd.f32 %v696, 0.4994258
  %v698 = vmul.f32 %v678, %v697
  %v699 = vadd.f32 %v698, 1.0
  %v700 = vrcp.pop %v699
  %v701 = vmul.f32 %v699, %v700
  %v702 = vsub.f32 1.0, %v701
  %v703 = vmul.f32 %v700, %v702
  %v704 = vadd.f32 %v700, %v703
  %vm705 = vweird.f32 %v699
  %vm706 = vweird.f32 %v700
  %vm707 = vmor %vm705, %vm706
  %v708 = vsel %vm707, %v700, %v704
  %v709 = vand.u32 2147483647, %v699
  %vm710 = vcmp.eq.f32.partialorder %v709, 8.507059e+37
  %v711 = vand.u32 %v699, 2147483648
  %v712 = vor.u32 1.1754944e-38, %v711
  %v713 = vsel %vm710, %v712, %v708
  %v714 = vmul.f32 %v689, %v713
  %v715 = vmin.f32 %v714, 1.0
  %v716 = vmax.f32 %v715, -1.0
  %v717 = vmul.f32 %v155, %v155
  %v718 = vmin.f32 16.0, %v717
  %v719 = vmul.f32 %v718, 2.1237322e-06
  %v720 = vadd.f32 %v719, 0.00028619796
  %v721 = vmul.f32 %v718, %v720
  %v722 = vadd.f32 %v721, 0.0036580483
  %v723 = vmul.f32 %v718, %v722
  %v724 = vadd.f32 %v723, 0.05243302
  %v725 = vmul.f32 %v718, %v724
  %v726 = vadd.f32 %v725, 0.18741608
  %v727 = vmul.f32 %v718, %v726
  %v728 = vadd.f32 %v727, 1.1283791
  %v729 = vmul.f32 %v155, %v728
  %v730 = vmul.f32 %v718, 3.8918573e-05
  %v731 = vadd.f32 %v730, 0.001143296
  %v732 = vmul.f32 %v718, %v731
  %v733 = vadd.f32 %v732, 0.014752088
  %v734 = vmul.f32 %v718, %v733
  %v735 = vadd.f32 %v734, 0.112945676
  %v736 = vmul.f32 %v718, %v735
  %v737 = vadd.f32 %v736, 0.4994258
  %v738 = vmul.f32 %v718, %v737
  %v739 = vadd.f32 %v738, 1.0
  %v740 = vrcp.pop %v739
  %v741 = vmul.f32 %v739, %v740
  %v742 = vsub.f32 1.0, %v741
  %v743 = vmul.f32 %v740, %v742
  %v744 = vadd.f32 %v740, %v743
  %vm745 = vweird.f32 %v739
  %vm746 = vweird.f32 %v740
  %vm747 = vmor %vm745, %vm746
  %v748 = vsel %vm747, %v740, %v744
  %v749 = vand.u32 2147483647, %v739
  %vm750 = vcmp.eq.f32.partialorder %v749, 8.507059e+37
  %v751 = vand.u32 %v739, 2147483648
  %v752 = vor.u32 1.1754944e-38, %v751
  %v753 = vsel %vm750, %v752, %v748
  %v754 = vmul.f32 %v729, %v753
  %v755 = vmin.f32 %v754, 1.0
  %v756 = vmax.f32 %v755, -1.0
  %v757 = vmul.f32 %v156, %v156
  %v758 = vmin.f32 16.0, %v757
  %v759 = vmul.f32 %v758, 2.1237322e-06
  %v760 = vadd.f32 %v759, 0.00028619796
  %v761 = vmul.f32 %v758, %v760
  %v762 = vadd.f32 %v761, 0.0036580483
  %v763 = vmul.f32 %v758, %v762
  %v764 = vadd.f32 %v763, 0.05243302
  %v765 = vmul.f32 %v758, %v764
  %v766 = vadd.f32 %v765, 0.18741608
  %v767 = vmul.f32 %v758, %v766
  %v768 = vadd.f32 %v767, 1.1283791
  %v769 = vmul.f32 %v156, %v768
  %v770 = vmul.f32 %v758, 3.8918573e-05
  %v771 = vadd.f32 %v770, 0.001143296
  %v772 = vmul.f32 %v758, %v771
  %v773 = vadd.f32 %v772, 0.014752088
  %v774 = vmul.f32 %v758, %v773
  %v775 = vadd.f32 %v774, 0.112945676
  %v776 = vmul.f32 %v758, %v775
  %v777 = vadd.f32 %v776, 0.4994258
  %v778 = vmul.f32 %v758, %v777
  %v779 = vadd.f32 %v778, 1.0
  %v780 = vrcp.pop %v779
  %v781 = vmul.f32 %v779, %v780
  %v782 = vsub.f32 1.0, %v781
  %v783 = vmul.f32 %v780, %v782
  %v784 = vadd.f32 %v780, %v783
  %vm785 = vweird.f32 %v779
  %vm786 = vweird.f32 %v780
  %vm787 = vmor %vm785, %vm786
  %v788 = vsel %vm787, %v780, %v784
  %v789 = vand.u32 2147483647, %v779
  %vm790 = vcmp.eq.f32.partialorder %v789, 8.507059e+37
  %v791 = vand.u32 %v779, 2147483648
  %v792 = vor.u32 1.1754944e-38, %v791
  %v793 = vsel %vm790, %v792, %v788
  %v794 = vmul.f32 %v769, %v793
  %v795 = vmin.f32 %v794, 1.0
  %v796 = vmax.f32 %v795, -1.0
  %v797 = vadd.f32 %v196, 1.0
  %v798 = vadd.f32 %v236, 1.0
  %v799 = vadd.f32 %v276, 1.0
  %v800 = vadd.f32 %v316, 1.0
  %v801 = vadd.f32 %v356, 1.0
  %v802 = vadd.f32 %v396, 1.0
  %v803 = vadd.f32 %v436, 1.0
  %v804 = vadd.f32 %v476, 1.0
  %v805 = vadd.f32 %v516, 1.0
  %v806 = vadd.f32 %v556, 1.0
  %v807 = vadd.f32 %v596, 1.0
  %v808 = vadd.f32 %v636, 1.0
  %v809 = vadd.f32 %v676, 1.0
  %v810 = vadd.f32 %v716, 1.0
  %v811 = vadd.f32 %v756, 1.0
  %v812 = vadd.f32 %v796, 1.0
  %v813 = vmul.f32 %v102, %v797
  %v814 = vmul.f32 %v104, %v798
  %v815 = vmul.f32 %v107, %v799
  %v816 = vmul.f32 %v109, %v800
  %v817 = vmul.f32 %v112, %v801
  %v818 = vmul.f32 %v114, %v802
  %v819 = vmul.f32 %v117, %v803
  %v820 = vmul.f32 %v119, %v804
  %v821 = vmul.f32 %v122, %v805
  %v822 = vmul.f32 %v124, %v806
  %v823 = vmul.f32 %v127, %v807
  %v824 = vmul.f32 %v129, %v808
  %v825 = vmul.f32 %v132, %v809
  %v826 = vmul.f32 %v134, %v810
  %v827 = vmul.f32 %v137, %v811
  %v828 = vmul.f32 %v139, %v812
  %v829 = vld [vmem:[%s3] sm:$0xff]
  %v830 = vld [vmem:[%s3 + $0x8] sm:$0xff]
  %v831 = vld [vmem:[%s3 + $0x10] sm:$0xff]
  %v832 = vld [vmem:[%s3 + $0x18] sm:$0xff]
  %v833 = vld [vmem:[%s3 + $0x20] sm:$0xff]
  %v834 = vld [vmem:[%s3 + $0x28] sm:$0xff]
  %v835 = vld [vmem:[%s3 + $0x30] sm:$0xff]
  %v836 = vld [vmem:[%s3 + $0x38] sm:$0xff]
  %v837 = vld [vmem:[%s3 + $0x40] sm:$0xff]
  %v838 = vld [vmem:[%s3 + $0x48] sm:$0xff]
  %v839 = vld [vmem:[%s3 + $0x50] sm:$0xff]
  %v840 = vld [vmem:[%s3 + $0x58] sm:$0xff]
  %v841 = vld [vmem:[%s3 + $0x60] sm:$0xff]
  %v842 = vld [vmem:[%s3 + $0x68] sm:$0xff]
  %v843 = vld [vmem:[%s3 + $0x70] sm:$0xff]
  %v844 = vld [vmem:[%s3 + $0x78] sm:$0xff]
  %v845 = vld [vmem:[#allocation2] sm:$0x1]
  %v847 = vperm.slane %v845, 0
  %849 = vmatpush.msra.mxu0 %v844
  %850 = vmatpush.msra.mxu0 %v843
  %851 = vmatpush.msra.mxu0 %v842
  %852 = vmatpush.msra.mxu0 %v841
  %853 = vmatpush.msra.mxu0 %v840
  %854 = vmatpush.msra.mxu0 %v839
  %855 = vmatpush.msra.mxu0 %v838
  %856 = vmatpush.msra.mxu0 %v837
  %857 = vmatpush.msra.mxu0 %v836
  %858 = vmatpush.msra.mxu0 %v835
  %859 = vmatpush.msra.mxu0 %v834
  %860 = vmatpush.msra.mxu0 %v833
  %861 = vmatpush.msra.mxu0 %v832
  %862 = vmatpush.msra.mxu0 %v831
  %863 = vmatpush.msra.mxu0 %v830
  %864 = vmatpush.msra.mxu0 %v829
  %865 = vmatmul.f32.gmra.mxu0 %v813
  %v866 = vpop.f32.mrf.mxu0
  %v867 = vadd.f32 %v847, %v866
  %868 = vmatmul.f32.gmra.mxu0 %v814
  %v869 = vpop.f32.mrf.mxu0
  %v870 = vadd.f32 %v847, %v869
  %871 = vmatmul.f32.gmra.mxu0 %v815
  %v872 = vpop.f32.mrf.mxu0
  %v873 = vadd.f32 %v847, %v872
  %874 = vmatmul.f32.gmra.mxu0 %v816
  %v875 = vpop.f32.mrf.mxu0
  %v876 = vadd.f32 %v847, %v875
  %877 = vmatmul.f32.gmra.mxu0 %v817
  %v878 = vpop.f32.mrf.mxu0
  %v879 = vadd.f32 %v847, %v878
  %880 = vmatmul.f32.gmra.mxu0 %v818
  %v881 = vpop.f32.mrf.mxu0
  %v882 = vadd.f32 %v847, %v881
  %883 = vmatmul.f32.gmra.mxu0 %v819
  %v884 = vpop.f32.mrf.mxu0
  %v885 = vadd.f32 %v847, %v884
  %886 = vmatmul.f32.gmra.mxu0 %v820
  %v887 = vpop.f32.mrf.mxu0
  %v888 = vadd.f32 %v847, %v887
  %889 = vmatmul.f32.gmra.mxu0 %v821
  %v890 = vpop.f32.mrf.mxu0
  %v891 = vadd.f32 %v847, %v890
  %892 = vmatmul.f32.gmra.mxu0 %v822
  %v893 = vpop.f32.mrf.mxu0
  %v894 = vadd.f32 %v847, %v893
  %895 = vmatmul.f32.gmra.mxu0 %v823
  %v896 = vpop.f32.mrf.mxu0
  %v897 = vadd.f32 %v847, %v896
  %898 = vmatmul.f32.gmra.mxu0 %v824
  %v899 = vpop.f32.mrf.mxu0
  %v900 = vadd.f32 %v847, %v899
  %901 = vmatmul.f32.gmra.mxu0 %v825
  %v902 = vpop.f32.mrf.mxu0
  %v903 = vadd.f32 %v847, %v902
  %904 = vmatmul.f32.gmra.mxu0 %v826
  %v905 = vpop.f32.mrf.mxu0
  %v906 = vadd.f32 %v847, %v905
  %907 = vmatmul.f32.gmra.mxu0 %v827
  %v908 = vpop.f32.mrf.mxu0
  %v909 = vadd.f32 %v847, %v908
  %910 = vmatmul.f32.gmra.mxu0 %v828
  %v911 = vpop.f32.mrf.mxu0
  %v912 = vadd.f32 %v847, %v911
  %913 = vdwg.mxu0
  %vm914 = vcmask 7168
  %915 = vst.msk [vmem:[%s5] sm:$0xff] %vm914, %v867
  %916 = vst.msk [vmem:[%s5 + $0x8] sm:$0xff] %vm914, %v870
  %917 = vst.msk [vmem:[%s5 + $0x10] sm:$0xff] %vm914, %v873
  %918 = vst.msk [vmem:[%s5 + $0x18] sm:$0xff] %vm914, %v876
  %919 = vst.msk [vmem:[%s5 + $0x20] sm:$0xff] %vm914, %v879
  %920 = vst.msk [vmem:[%s5 + $0x28] sm:$0xff] %vm914, %v882
  %921 = vst.msk [vmem:[%s5 + $0x30] sm:$0xff] %vm914, %v885
  %922 = vst.msk [vmem:[%s5 + $0x38] sm:$0xff] %vm914, %v888
  %923 = vst.msk [vmem:[%s5 + $0x40] sm:$0xff] %vm914, %v891
  %924 = vst.msk [vmem:[%s5 + $0x48] sm:$0xff] %vm914, %v894
  %925 = vst.msk [vmem:[%s5 + $0x50] sm:$0xff] %vm914, %v897
  %926 = vst.msk [vmem:[%s5 + $0x58] sm:$0xff] %vm914, %v900
  %927 = vst.msk [vmem:[%s5 + $0x60] sm:$0xff] %vm914, %v903
  %928 = vst.msk [vmem:[%s5 + $0x68] sm:$0xff] %vm914, %v906
  %929 = vst.msk [vmem:[%s5 + $0x70] sm:$0xff] %vm914, %v909
  %930 = vst.msk [vmem:[%s5 + $0x78] sm:$0xff] %vm914, %v912
  // Predicated region
  $region22: #{mlp_forward.1} parent=0 // pred_check
    _
  $region23: #{mlp_forward.1} parent=0 // pred_check_branch
    %932 = sbr.rel (0) target = $region25
  $region24: #{mlp_forward.1} parent=0 // pred_region
    _
  $region25: #{mlp_forward.1} parent=0 // pred_fallthru
    _
  // Predicated region
  $region26: #{mlp_forward.1} parent=0 // pred_check
    _
  $region27: #{mlp_forward.1} parent=0 // pred_check_branch
    %934 = sbr.rel (0) target = $region29
  $region28: #{mlp_forward.1} parent=0 // pred_region
    _
  $region29: #{mlp_forward.1} parent=0 // pred_fallthru
    _

</llo_original>
